<compile_context>
chip_gen: v7x
topology: tpu7x:2x2x1
jax: 0.10.0
libtpu: 0.0.40
codegen_flags: <defaults>
</compile_context>

<pallas_src>
import jax
import jax.numpy as jnp
from jax.experimental import pallas as pl
from jax.experimental.pallas import tpu as pltpu


# Target bytes moved per grid step (input block + output block).
_TARGET_STEP_BYTES = 6 * 1024 * 1024
_VMEM_LIMIT_BYTES = 32 * 1024 * 1024


def _rgb_to_ycbcr_kernel(x_ref, o_ref):
    # x_ref / o_ref: (TB, 3, TR, TL) VMEM tiles.
    # Each channel slab (TB, TR, TL) is sublane/lane dense.
    r = x_ref[:, 0, :, :].astype(jnp.float32)
    g = x_ref[:, 1, :, :].astype(jnp.float32)
    b = x_ref[:, 2, :, :].astype(jnp.float32)

    delta = 128.0 / 255.0
    y = 0.299 * r + 0.587 * g + 0.114 * b
    cb = -0.168736 * r - 0.331264 * g + 0.5 * b + delta
    cr = 0.5 * r - 0.418688 * g - 0.081312 * b + delta

    o_ref[:, 0, :, :] = y.astype(o_ref.dtype)
    o_ref[:, 1, :, :] = cb.astype(o_ref.dtype)
    o_ref[:, 2, :, :] = cr.astype(o_ref.dtype)


def rgb_to_ycbcr(image: jax.Array) -> jax.Array:
    """Pallas TPU implementation of kornia's rgb_to_ycbcr.

    Accepts (*, 3, H, W); returns the same shape. Float inputs keep their
    dtype (compute in f32 internally); integer inputs are promoted to float32.
    """
    if image.ndim < 3 or image.shape[-3] != 3:
        raise ValueError(
            "Input size must have a shape of (*, 3, H, W). Got {}".format(image.shape)
        )

    orig_shape = image.shape
    H, W = orig_shape[-2], orig_shape[-1]
    P = H * W
    x = image.reshape((-1, 3, H, W))
    B = x.shape[0]

    out_dtype = (
        image.dtype if jnp.issubdtype(image.dtype, jnp.floating) else jnp.float32
    )

    # --- Layout: make each channel a dense (rows, lanes) slab. ---
    if P % 128 == 0:
        L = 128
        M = P // 128
        x = x.reshape((B, 3, M, L))
    else:
        # Fallback for odd spatial sizes: keep (H, W); W is the full-extent
        # lane dim (allowed by the (8,128) rule), rows tiled by multiples of 8.
        L = W
        M = H

    in_item = jnp.dtype(x.dtype).itemsize
    out_item = jnp.dtype(out_dtype).itemsize

    # --- Tile sizing: ~6 MiB (in+out) per step, rows in multiples of 8. ---
    bytes_per_row = 3 * L * (in_item + out_item)
    rows_target = max(1, _TARGET_STEP_BYTES // bytes_per_row)

    if M <= rows_target:
        TR = M
        TB = max(1, min(B, rows_target // max(M, 1)))
    else:
        TB = 1
        TR = min(M, max(8, (rows_target // 8) * 8))
        if TR % 8 != 0 and TR != M:
            TR = M  # keep the sublane (multiple-of-8 or full-dim) rule

    grid_b = pl.cdiv(B, TB)
    grid_r = pl.cdiv(M, TR)

    # --- Guarantee >=2 parallel steps where feasible (v7x: 2 TensorCores,
    # and a single-step grid cannot pipeline DMA against compute). ---
    if grid_b * grid_r == 1:
        if B >= 2:
            TB = pl.cdiv(B, 2)
            grid_b = pl.cdiv(B, TB)
        elif M >= 16:
            parts = 4 if M >= 64 else 2
            TR = max(8, 8 * pl.cdiv(pl.cdiv(M, parts), 8))
            grid_r = pl.cdiv(M, TR)

    grid = (grid_b, grid_r)

    cost = pl.CostEstimate(
        flops=17 * B * P,
        transcendentals=0,
        bytes_accessed=B * 3 * P * (in_item + out_item),
    )

    out = pl.pallas_call(
        _rgb_to_ycbcr_kernel,
        out_shape=jax.ShapeDtypeStruct((B, 3, M, L), out_dtype),
        grid=grid,
        in_specs=[pl.BlockSpec((TB, 3, TR, L), lambda i, j: (i, 0, j, 0))],
        out_specs=pl.BlockSpec((TB, 3, TR, L), lambda i, j: (i, 0, j, 0)),
        compiler_params=pltpu.CompilerParams(
            dimension_semantics=("parallel", "parallel"),
            vmem_limit_bytes=_VMEM_LIMIT_BYTES,
        ),
        cost_estimate=cost,
    )(x)

    return out.reshape(orig_shape[:-3] + (3, H, W))


def _reference(image: jax.Array) -> jax.Array:
    r = image[..., 0, :, :].astype(jnp.float32)
    g = image[..., 1, :, :].astype(jnp.float32)
    b = image[..., 2, :, :].astype(jnp.float32)
    delta = 128.0 / 255.0
    y = 0.299 * r + 0.587 * g + 0.114 * b
    cb = -0.168736 * r - 0.331264 * g + 0.5 * b + delta
    cr = 0.5 * r - 0.418688 * g - 0.081312 * b + delta
    return jnp.stack([y, cb, cr], axis=-3).astype(image.dtype)


if __name__ == "__main__":
    key = jax.random.PRNGKey(0)
    # (*, 3, H, W): batch=2, channels=3 (required by the op), spatial=16
    x = jax.random.uniform(key, (2, 3, 16, 16), dtype=jnp.float32)

    out = rgb_to_ycbcr(x)
    out = jax.block_until_ready(out)

    ref = _reference(x)
    assert out.shape == x.shape, (out.shape, x.shape)
    assert out.dtype == x.dtype, (out.dtype, x.dtype)
    assert jnp.allclose(out, ref, atol=1e-6), "mismatch vs reference"
    print("KERNEL_OK")
</pallas_src>

<mosaic_0001>
module attributes {stable_mosaic.version = 11 : i64} {
  func.func @_rgb_to_ycbcr_kernel(%arg0: i32, %arg1: i32, %arg2: memref<1x3x2x128xf32, #tpu.memory_space<vmem>>, %arg3: memref<1x3x2x128xf32, #tpu.memory_space<vmem>>) attributes {dimension_semantics = [#tpu.dimension_semantics<parallel>, #tpu.dimension_semantics<parallel>], iteration_bounds = array<i64: 2, 1>, scalar_prefetch = 0 : i64, scratch_operands = 0 : i64, tpu.core_type = #tpu.core_type<tc>, window_params = [{transform_indices = @transform_0, window_bounds = array<i64: 1, 3, 2, 128>}, {transform_indices = @transform_1, window_bounds = array<i64: 1, 3, 2, 128>}]} {
    %c0 = arith.constant 0 : index
    %c0_0 = arith.constant 0 : index
    %c0_1 = arith.constant 0 : index
    %c0_2 = arith.constant 0 : index
    %0 = vector.load %arg2[%c0, %c0_0, %c0_1, %c0_2] : memref<1x3x2x128xf32, #tpu.memory_space<vmem>>, vector<1x1x2x128xf32>
    %1 = vector.shape_cast %0 : vector<1x1x2x128xf32> to vector<1x2x128xf32>
    %c0_3 = arith.constant 0 : index
    %c1 = arith.constant 1 : index
    %c0_4 = arith.constant 0 : index
    %c0_5 = arith.constant 0 : index
    %2 = vector.load %arg2[%c0_3, %c1, %c0_4, %c0_5] : memref<1x3x2x128xf32, #tpu.memory_space<vmem>>, vector<1x1x2x128xf32>
    %3 = vector.shape_cast %2 : vector<1x1x2x128xf32> to vector<1x2x128xf32>
    %c0_6 = arith.constant 0 : index
    %c2 = arith.constant 2 : index
    %c0_7 = arith.constant 0 : index
    %c0_8 = arith.constant 0 : index
    %4 = vector.load %arg2[%c0_6, %c2, %c0_7, %c0_8] : memref<1x3x2x128xf32, #tpu.memory_space<vmem>>, vector<1x1x2x128xf32>
    %5 = vector.shape_cast %4 : vector<1x1x2x128xf32> to vector<1x2x128xf32>
    %cst = arith.constant 2.990000e-01 : f32
    %6 = vector.broadcast %cst : f32 to vector<1x2x128xf32>
    %7 = arith.mulf %6, %1 : vector<1x2x128xf32>
    %cst_9 = arith.constant 5.870000e-01 : f32
    %8 = vector.broadcast %cst_9 : f32 to vector<1x2x128xf32>
    %9 = arith.mulf %8, %3 : vector<1x2x128xf32>
    %10 = arith.addf %7, %9 : vector<1x2x128xf32>
    %cst_10 = arith.constant 1.140000e-01 : f32
    %11 = vector.broadcast %cst_10 : f32 to vector<1x2x128xf32>
    %12 = arith.mulf %11, %5 : vector<1x2x128xf32>
    %13 = arith.addf %10, %12 : vector<1x2x128xf32>
    %cst_11 = arith.constant -1.687360e-01 : f32
    %14 = vector.broadcast %cst_11 : f32 to vector<1x2x128xf32>
    %15 = arith.mulf %14, %1 : vector<1x2x128xf32>
    %cst_12 = arith.constant 3.312640e-01 : f32
    %16 = vector.broadcast %cst_12 : f32 to vector<1x2x128xf32>
    %17 = arith.mulf %16, %3 : vector<1x2x128xf32>
    %18 = arith.subf %15, %17 : vector<1x2x128xf32>
    %cst_13 = arith.constant 5.000000e-01 : f32
    %19 = vector.broadcast %cst_13 : f32 to vector<1x2x128xf32>
    %20 = arith.mulf %19, %5 : vector<1x2x128xf32>
    %21 = arith.addf %18, %20 : vector<1x2x128xf32>
    %cst_14 = arith.constant 0.501960814 : f32
    %22 = vector.broadcast %cst_14 : f32 to vector<1x2x128xf32>
    %23 = arith.addf %21, %22 : vector<1x2x128xf32>
    %cst_15 = arith.constant 5.000000e-01 : f32
    %24 = vector.broadcast %cst_15 : f32 to vector<1x2x128xf32>
    %25 = arith.mulf %24, %1 : vector<1x2x128xf32>
    %cst_16 = arith.constant 4.186880e-01 : f32
    %26 = vector.broadcast %cst_16 : f32 to vector<1x2x128xf32>
    %27 = arith.mulf %26, %3 : vector<1x2x128xf32>
    %28 = arith.subf %25, %27 : vector<1x2x128xf32>
    %cst_17 = arith.constant 8.131200e-02 : f32
    %29 = vector.broadcast %cst_17 : f32 to vector<1x2x128xf32>
    %30 = arith.mulf %29, %5 : vector<1x2x128xf32>
    %31 = arith.subf %28, %30 : vector<1x2x128xf32>
    %cst_18 = arith.constant 0.501960814 : f32
    %32 = vector.broadcast %cst_18 : f32 to vector<1x2x128xf32>
    %33 = arith.addf %31, %32 : vector<1x2x128xf32>
    %c0_19 = arith.constant 0 : index
    %c0_20 = arith.constant 0 : index
    %c0_21 = arith.constant 0 : index
    %c0_22 = arith.constant 0 : index
    %34 = vector.load %arg3[%c0_19, %c0_20, %c0_21, %c0_22] : memref<1x3x2x128xf32, #tpu.memory_space<vmem>>, vector<1x1x2x128xf32>
    %35 = vector.shape_cast %34 : vector<1x1x2x128xf32> to vector<1x2x128xf32>
    %36 = vector.shape_cast %13 : vector<1x2x128xf32> to vector<1x1x2x128xf32>
    tpu.vector_store %arg3[%c0_19, %c0_20, %c0_21, %c0_22], %36 {strides = array<i32>} : memref<1x3x2x128xf32, #tpu.memory_space<vmem>>, vector<1x1x2x128xf32>,
    %c0_23 = arith.constant 0 : index
    %c1_24 = arith.constant 1 : index
    %c0_25 = arith.constant 0 : index
    %c0_26 = arith.constant 0 : index
    %37 = vector.load %arg3[%c0_23, %c1_24, %c0_25, %c0_26] : memref<1x3x2x128xf32, #tpu.memory_space<vmem>>, vector<1x1x2x128xf32>
    %38 = vector.shape_cast %37 : vector<1x1x2x128xf32> to vector<1x2x128xf32>
    %39 = vector.shape_cast %23 : vector<1x2x128xf32> to vector<1x1x2x128xf32>
    tpu.vector_store %arg3[%c0_23, %c1_24, %c0_25, %c0_26], %39 {strides = array<i32>} : memref<1x3x2x128xf32, #tpu.memory_space<vmem>>, vector<1x1x2x128xf32>,
    %c0_27 = arith.constant 0 : index
    %c2_28 = arith.constant 2 : index
    %c0_29 = arith.constant 0 : index
    %c0_30 = arith.constant 0 : index
    %40 = vector.load %arg3[%c0_27, %c2_28, %c0_29, %c0_30] : memref<1x3x2x128xf32, #tpu.memory_space<vmem>>, vector<1x1x2x128xf32>
    %41 = vector.shape_cast %40 : vector<1x1x2x128xf32> to vector<1x2x128xf32>
    %42 = vector.shape_cast %33 : vector<1x2x128xf32> to vector<1x1x2x128xf32>
    tpu.vector_store %arg3[%c0_27, %c2_28, %c0_29, %c0_30], %42 {strides = array<i32>} : memref<1x3x2x128xf32, #tpu.memory_space<vmem>>, vector<1x1x2x128xf32>,
    return
  }
  func.func @transform_0(%arg0: i32, %arg1: i32) -> (i32, i32, i32, i32) {
    %c0_i32 = arith.constant 0 : i32
    %c0_i32_0 = arith.constant 0 : i32
    %c0_i32_1 = arith.constant 0 : i32
    return %arg0, %c0_i32, %arg1, %c0_i32_0 : i32, i32, i32, i32
  }
  func.func @transform_1(%arg0: i32, %arg1: i32) -> (i32, i32, i32, i32) {
    %c0_i32 = arith.constant 0 : i32
    %c0_i32_0 = arith.constant 0 : i32
    %c0_i32_1 = arith.constant 0 : i32
    return %arg0, %c0_i32, %arg1, %c0_i32_0 : i32, i32, i32, i32
  }
}

</mosaic_0001>

<llo_original>
// kernel: tpu_custom_call.1
$region0: #{tpu_custom_call.1}
  #allocation0 [shape = 'u32[]', space=smem, size = 0x4, offset = 0x4, fixed_abs, tag = 'smem constant byte address 0x4 - core index']
  #allocation1 [shape = 'u32[144,128]{1,0:T(1,128)}', space=vmem, size = 0x12000, scoped, tag = 'internal scratch']
  %s0 = inlined_call_operand.hbm [shape: f32[2,3,2,128], index: 0, kind: input, shape index: {}]
  %s1 = inlined_call_operand.hbm [shape: f32[2,3,2,128], index: 1, kind: output, shape index: {}]
  %s2 = sld [smem:[#allocation0]]
  $region41: #{tpu_custom_call.1} parent=0
    _
  %s4 = ssub.s32 1, %s2
  %s5 = scalar_select 0, %s4, %s2
  $region1: #{tpu_custom_call.1} parent=0
    #allocation2 [shape = 'u8[6144]{0}', space=vmem, size = 0x1800, scoped, tag = 'input window, operand 0']
    #allocation3 [shape = 's32[2]{0}', space=sflag, size = 0x8, scoped, tag = 'scoped memory for tpu_custom_call.1']
    #allocation4 [shape = 's32[2]{0}', space=sflag, size = 0x8, scoped, tag = 'scoped memory for tpu_custom_call.1']
    #allocation5 [shape = 'u8[6144]{0}', space=vmem, size = 0x1800, scoped, tag = 'output window, operand 0']
    %6 = vsyncpa [#allocation3], 0
    %s7 = scalar_lea.sflag [#allocation3], 1
    %8 = vsyncpa %s7, 0
    %9 = vsyncpa [#allocation4], 0
    %s10 = scalar_lea.sflag [#allocation4], 1
    %11 = vsyncpa %s10, 0
    loop: start=0, step=1, limit=4
    $region2: #{tpu_custom_call.1} parent=1 // loop_pre_header
      _
    $region3: #{tpu_custom_call.1} parent=1 // loop_header
      %s13 = sphi 0, %s17
      %p14 = scmp.ge.s32.totalorder %s13, 4
      %s20 = sphi 0, %s32
      %s21 = sphi 0, %s28
      %s22 = sphi 0, %s20
      %s23 = sphi 0, %s21
      %s24 = sphi 0, %s22
      %s25 = sphi 0, %s23
      %s37 = sphi 0, %s39
      %s40 = sphi 0, %s37
      %s41 = sphi 0, %s40
      %s57 = sphi 0, %s41
      %s65 = sphi 0, %s67
      %s68 = sphi 0, %s65
      %s69 = sphi 0, %s68
      %s85 = sphi 0, %s69
    $region4: #{tpu_custom_call.1} parent=1 // loop_header_branch
      %16 = sbr.rel (%p14) target = $region8
    $region5: #{tpu_custom_call.1} parent=1 // loop_body
      %s18 = ssub.s32 %s13, 1
      %s19 = ssub.s32 %s13, 2
      %s26 = sadd.s32 1, %s21
      %p27 = scmp.ge.s32.totalorder %s26, 1
      %s28 = scalar_select %p27, 0, %s26
      %s29 = sadd.s32 1, %s20
      %s30 = scalar_select %p27, %s29, %s20
      %p31 = scmp.ge.s32.totalorder %s30, 2
      %s32 = scalar_select %p31, 0, %s30
      %s33 = ssub.s32 %s20, %s32
      %s34 = ssub.s32 %s21, %s28
      %s35 = sor.u32 %s33, %s34
      %p36 = scmp.eq.s32.totalorder %s35, 0
      %s38 = sadd.s32 %s37, 1
      %s39 = scalar_select %p36, %s37, %s38
      %p42 = pneg %p36
      %p43 = scmp.eq.s32.totalorder %s13, 1
      %p44 = por %p42, %p43
      %p45 = scmp.ne.s32.totalorder %s37, %s40
      %p46 = scmp.eq.s32.totalorder %s13, 0
      %p47 = por %p45, %p46
      %p48 = scmp.ne.s32.totalorder %s37, %s40
      %p49 = scmp.eq.s32.totalorder %s18, 1
      %p50 = por %p48, %p49
      %p51 = scmp.ne.s32.totalorder %s40, %s41
      %p52 = scmp.eq.s32.totalorder %s18, 0
      %p53 = por %p51, %p52
      %p54 = scmp.ne.s32.totalorder %s40, %s41
      %p55 = scmp.eq.s32.totalorder %s19, 1
      %p56 = por %p54, %p55
      %p58 = scmp.ne.s32.totalorder %s41, %s57
      %p59 = scmp.eq.s32.totalorder %s19, 0
      %p60 = por %p58, %p59
      %s61 = ssub.s32 %s20, %s32
      %s62 = ssub.s32 %s21, %s28
      %s63 = sor.u32 %s61, %s62
      %p64 = scmp.eq.s32.totalorder %s63, 0
      %s66 = sadd.s32 %s65, 1
      %s67 = scalar_select %p64, %s65, %s66
      %p70 = pneg %p64
      %p71 = scmp.eq.s32.totalorder %s13, 1
      %p72 = por %p70, %p71
      %p73 = scmp.ne.s32.totalorder %s65, %s68
      %p74 = scmp.eq.s32.totalorder %s13, 0
      %p75 = por %p73, %p74
      %p76 = scmp.ne.s32.totalorder %s65, %s68
      %p77 = scmp.eq.s32.totalorder %s18, 1
      %p78 = por %p76, %p77
      %p79 = scmp.ne.s32.totalorder %s68, %s69
      %p80 = scmp.eq.s32.totalorder %s18, 0
      %p81 = por %p79, %p80
      %p82 = scmp.ne.s32.totalorder %s68, %s69
      %p83 = scmp.eq.s32.totalorder %s19, 1
      %p84 = por %p82, %p83
      %p86 = scmp.ne.s32.totalorder %s69, %s85
      %p87 = scmp.eq.s32.totalorder %s19, 0
      %p88 = por %p86, %p87
      %p89 = scmp.le.s32.totalorder 1, %s13
      %p90 = scmp.lt.s32.totalorder %s13, 3
      %p91 = pnand %p89, %p90
      %p92 = pneg %p91
      // Predicated region
      $region9: #{tpu_custom_call.1} parent=5 // pred_check
        _
      $region10: #{tpu_custom_call.1} parent=5 // pred_check_branch
        %94 = sbr.rel (%p91) target = $region12
      $region11: #{tpu_custom_call.1} parent=5 // pred_region
        %s95 = ssub.s32 %s13, 1
      $region12: #{tpu_custom_call.1} parent=5 // pred_fallthru
        _
      %p96 = scmp.lt.s32.totalorder %s13, 2
      // Predicated region
      $region13: #{tpu_custom_call.1} parent=5 // pred_check
        %p97 = pneg %p96
      $region14: #{tpu_custom_call.1} parent=5 // pred_check_branch
        %99 = sbr.rel (%p97) target = $region16
      $region15: #{tpu_custom_call.1} parent=5 // pred_region
        // Predicated region
        $region17: #{tpu_custom_call.1} parent=15 // pred_check
          %p100 = pneg %p47
        $region18: #{tpu_custom_call.1} parent=15 // pred_check_branch
          %102 = sbr.rel (%p100) target = $region20
        $region19: #{tpu_custom_call.1} parent=15 // pred_region
          %s103 = sand.u32 %s37, 1
          %s104 = scalar_lea.sflag [#allocation3], %s103
          %s105 = sand.u32 %s37, 1
          %s106 = smul.addr %s105, 6
          %s107 = scalar_lea.vmem [#allocation2], %s106
          %s109 = ssub.s32 96, 96
          %110 = vsyncadd %s104, %s109
          %s111 = smul.addr %s20, 3
          %s112 = sadd.s32 %s21, %s111
          %s113 = smul.addr %s112, 32
          %s114 = scalar_lea.hbm %s0, %s113
          %s115 = sshll.u32 %s107, 4
          %s116 = int_to_ptr.vmem [resolvable:$true] %s115
          %121 = dma.hbm_to_vmem [thread:$0]  %s114, 96, %s116, %s104, 32, 32, 2
        $region20: #{tpu_custom_call.1} parent=15 // pred_fallthru
          _
      $region16: #{tpu_custom_call.1} parent=5 // pred_fallthru
        _
      %p122 = scmp.le.s32.totalorder 1, %s13
      %p123 = scmp.lt.s32.totalorder %s13, 3
      %p124 = pnand %p122, %p123
      %p125 = pneg %p124
      // Predicated region
      $region21: #{tpu_custom_call.1} parent=5 // pred_check
        _
      $region22: #{tpu_custom_call.1} parent=5 // pred_check_branch
        %127 = sbr.rel (%p124) target = $region24
      $region23: #{tpu_custom_call.1} parent=5 // pred_region
        %s128 = ssub.s32 %s13, 1
        %s129 = sand.u32 %s40, 1
        %s130 = scalar_lea.sflag [#allocation3], %s129
        %s131 = sand.u32 %s40, 1
        %s132 = smul.addr %s131, 6
        %s133 = scalar_lea.vmem [#allocation2], %s132
        // Predicated region
        $region25: #{tpu_custom_call.1} parent=23 // pred_check
          %p134 = pneg %p53
        $region26: #{tpu_custom_call.1} parent=23 // pred_check_branch
          %136 = sbr.rel (%p134) target = $region28
        $region27: #{tpu_custom_call.1} parent=23 // pred_region
          %137 = dma.done %s130, 96
        $region28: #{tpu_custom_call.1} parent=23 // pred_fallthru
          _
        %s138 = sand.u32 %s40, 1
        %s139 = scalar_lea.sflag [#allocation3], %s138
        %s140 = sand.u32 %s40, 1
        %s141 = smul.addr %s140, 6
        %s142 = scalar_lea.vmem [#allocation2], %s141
        %p143 = pneg %p53
        %p144 = pneg %p50
        %p145 = pneg %p81
        %p146 = pneg %p78
        %s147 = sand.u32 %s68, 1
        %s148 = scalar_lea.sflag [#allocation4], %s147
        %s149 = sand.u32 %s68, 1
        %s150 = smul.addr %s149, 6
        %s151 = scalar_lea.vmem [#allocation5], %s150
        %v152 = vld [vmem:[%s133] sm:$0x3]
        %s153 = scalar_lea.vmem %s133, 2 [#allocation2]
        %v154 = vld [vmem:[%s153] sm:$0x3]
        %s155 = scalar_lea.vmem %s133, 4 [#allocation2]
        %v156 = vld [vmem:[%s155] sm:$0x3]
        %v157 = vmul.f32 %v152, 0.299
        %v158 = vmul.f32 %v154, 0.587
        %v159 = vadd.f32 %v157, %v158
        %v160 = vmul.f32 %v156, 0.114
        %v161 = vadd.f32 %v159, %v160
        %v162 = vmul.f32 %v152, -0.168736
        %v163 = vmul.f32 %v154, 0.331264
        %v164 = vsub.f32 %v162, %v163
        %v165 = vmul.f32 %v156, 0.5
        %v166 = vadd.f32 %v164, %v165
        %v167 = vadd.f32 %v166, 0.5019608
        %v168 = vmul.f32 %v152, 0.5
        %v169 = vmul.f32 %v154, 0.418688
        %v170 = vsub.f32 %v168, %v169
        %v171 = vmul.f32 %v156, 0.081312
        %v172 = vsub.f32 %v170, %v171
        %v173 = vadd.f32 %v172, 0.5019608
        %174 = vst [vmem:[%s151] sm:$0x3] %v161
        %s175 = scalar_lea.vmem %s151, 2 [#allocation5]
        %176 = vst [vmem:[%s175] sm:$0x3] %v167
        %s177 = scalar_lea.vmem %s151, 4 [#allocation5]
        %178 = vst [vmem:[%s177] sm:$0x3] %v173
        %s179 = sand.u32 %s68, 1
        %s180 = scalar_lea.sflag [#allocation4], %s179
        %s181 = sand.u32 %s68, 1
        %s182 = smul.addr %s181, 6
        %s183 = scalar_lea.vmem [#allocation5], %s182
        // Predicated region
        $region29: #{tpu_custom_call.1} parent=23 // pred_check
          %p184 = pneg %p78
        $region30: #{tpu_custom_call.1} parent=23 // pred_check_branch
          %186 = sbr.rel (%p184) target = $region32
        $region31: #{tpu_custom_call.1} parent=23 // pred_region
          %s188 = ssub.s32 96, 96
          %189 = vsyncadd %s180, %s188
          %s190 = smul.addr %s22, 3
          %s191 = sadd.s32 %s23, %s190
          %s192 = smul.addr %s191, 32
          %s193 = scalar_lea.hbm %s1, %s192
          %s194 = sshll.u32 %s183, 4
          %s195 = int_to_ptr.vmem [resolvable:$true] %s194
          %200 = dma.vmem_to_hbm [thread:$0]  %s195, 96, %s193, %s180, 32, 32, 2
        $region32: #{tpu_custom_call.1} parent=23 // pred_fallthru
          _
      $region24: #{tpu_custom_call.1} parent=5 // pred_fallthru
        _
      %p201 = scmp.le.s32.totalorder 2, %s13
      // Predicated region
      $region33: #{tpu_custom_call.1} parent=5 // pred_check
        %p202 = pneg %p201
      $region34: #{tpu_custom_call.1} parent=5 // pred_check_branch
        %204 = sbr.rel (%p202) target = $region36
      $region35: #{tpu_custom_call.1} parent=5 // pred_region
        %s205 = ssub.s32 %s13, 2
        // Predicated region
        $region37: #{tpu_custom_call.1} parent=35 // pred_check
          %p206 = pneg %p84
        $region38: #{tpu_custom_call.1} parent=35 // pred_check_branch
          %208 = sbr.rel (%p206) target = $region40
        $region39: #{tpu_custom_call.1} parent=35 // pred_region
          %s209 = sand.u32 %s69, 1
          %s210 = scalar_lea.sflag [#allocation4], %s209
          %s211 = sand.u32 %s69, 1
          %s212 = smul.addr %s211, 6
          %s213 = scalar_lea.vmem [#allocation5], %s212
          %214 = dma.done %s210, 96
        $region40: #{tpu_custom_call.1} parent=35 // pred_fallthru
          _
      $region36: #{tpu_custom_call.1} parent=5 // pred_fallthru
        _
    $region6: #{tpu_custom_call.1} parent=1 // loop_footer
      %s17 = sadd.s32 1, %s13
    $region7: #{tpu_custom_call.1} parent=1 // loop_footer_branch
      %12 = sbr.rel target = $region3
    $region8: #{tpu_custom_call.1} parent=1 // loop_exit
      _
    %215 = vsyncpa [#allocation3], 1
    %s216 = scalar_lea.sflag [#allocation3], 1
    %217 = vsyncpa %s216, 1
    %218 = vsyncpa [#allocation4], 1
    %s219 = scalar_lea.sflag [#allocation4], 1
    %220 = vsyncpa %s219, 1

</llo_original>
